<compile_context>
chip_gen: v6e
topology: v6e:2x2x1
jax: 0.10.0
libtpu: 0.0.40
codegen_flags: <defaults>
</compile_context>

<pallas_src>
import jax
import jax.numpy as jnp
import numpy as np
from jax.experimental import pallas as pl
from jax.experimental.pallas import tpu as pltpu


def _round_up(x, m):
    return ((x + m - 1) // m) * m


def _pick_tiles(n_pad):
    """Pick (TM, TK) among divisors of n_pad (n_pad is a multiple of 128)."""
    tk = 128
    for cand in (1024, 512, 256, 128):
        if n_pad % cand == 0:
            tk = cand
            break
    tm = None
    for cand in (512, 256, 128):
        # keep at least 2 row tiles so the v7x megacore has work for both TCs
        if n_pad % cand == 0 and (n_pad // cand) >= 2:
            tm = cand
            break
    if tm is None:
        for cand in (512, 256, 128):
            if n_pad % cand == 0:
                tm = cand
                break
    return tm, tk


def _gcn_kernel(feat_dst_ref,   # (TM, F_in)        dst-row features (self branch)
                feat_src_ref,   # (TK, F_in)        src-row features (aggregation)
                adj_ref,        # (TM, TK)          A[dst,src] * out_norm[src]
                innorm_ref,     # (TM, 1)   f32     in-degree norm for dst rows
                wself_ref,      # (F_in, F_out_pad) W_self^T
                w_ref,          # (F_in, F_out_pad) W^T
                b_ref,          # (1, F_out_pad) f32 bias
                out_ref,        # (TM, F_out_pad) f32 output tile
                acc_ref):       # (TM, F_in) f32    aggregation accumulator
    k = pl.program_id(1)

    @pl.when(k == 0)
    def _():
        acc_ref[...] = jnp.zeros_like(acc_ref)

    # Weighted, source-normalized neighbor aggregation (the HBM-bound contraction).
    acc_ref[...] += jnp.dot(adj_ref[...], feat_src_ref[...],
                            preferred_element_type=jnp.float32)

    @pl.when(k == pl.num_programs(1) - 1)
    def _():
        in_norm = innorm_ref[...]                                   # (TM, 1) f32
        h_self = jnp.dot(feat_dst_ref[...], wself_ref[...],
                         preferred_element_type=jnp.float32)
        agg = (acc_ref[...] * in_norm).astype(w_ref.dtype)
        h_nbr = jnp.dot(agg, w_ref[...], preferred_element_type=jnp.float32)
        out_ref[...] = (h_self + h_nbr + b_ref[...] * in_norm).astype(out_ref.dtype)
    # TODO(synk): BatchNorm1d output is computed-and-discarded by the reference
    # forward (only running stats would change, and only in training); omitted.
    # TODO(synk): dropout is identity in eval mode; not applied.
    # TODO(synk): for very large F_in*F_out the resident weight slabs can exceed
    # v7x's 64 MiB VMEM; in that regime add a grid axis tiling F_out_pad (256-512).
    # TODO(synk): on v7x an fp8 adjacency (f32 accumulation) would halve the
    # dominant HBM stream again; needs an accuracy validation pass.


def prepare_gcn_params(w_self, w, b, compute_dtype=jnp.bfloat16):
    """One-time weight layout: transpose, lane-pad F_out to a multiple of 128,
    cast to the matmul operand dtype."""
    f_out, f_in = np.shape(w)
    f_out_pad = _round_up(int(f_out), 128)
    pad = ((0, 0), (0, f_out_pad - int(f_out)))
    w_self_t = jnp.pad(jnp.asarray(w_self, jnp.float32).T, pad).astype(compute_dtype)
    w_t = jnp.pad(jnp.asarray(w, jnp.float32).T, pad).astype(compute_dtype)
    b_pad = jnp.pad(jnp.asarray(b, jnp.float32),
                    (0, f_out_pad - int(f_out))).reshape(1, f_out_pad)
    return w_self_t, w_t, b_pad, int(f_out)


def prepare_gcn_graph(adj_w, out_deg, in_deg, compute_dtype=jnp.bfloat16):
    """One-time graph prep: fold the source-side norm into the adjacency, pad the
    node dim to a multiple of 128 (padding waste capped at <128 rows/cols), and
    store in the matmul operand dtype so the per-call wrapper never touches the
    N^2 stream again."""
    n = adj_w.shape[0]
    n_pad = _round_up(max(int(n), 1), 128)
    out_norm = jax.lax.rsqrt(jnp.maximum(jnp.asarray(out_deg, jnp.float32), 1.0))
    in_norm = jax.lax.rsqrt(jnp.maximum(jnp.asarray(in_deg, jnp.float32), 1.0))
    adj_n = jnp.asarray(adj_w, jnp.float32) * out_norm.reshape(1, n)
    adj_n = jnp.pad(adj_n, ((0, n_pad - n), (0, n_pad - n))).astype(compute_dtype)
    in_norm_p = jnp.pad(in_norm.reshape(n, 1), ((0, n_pad - n), (0, 0)))
    return adj_n, in_norm_p


def gcn_layer_forward(feature, adj_n, in_norm, w_self_t, w_t, b_pad, f_out):
    """feature (N, F_in); adj_n / in_norm from prepare_gcn_graph; w_* / b_pad /
    f_out from prepare_gcn_params. Returns (N, F_out) float32."""
    n, f_in = feature.shape
    n_pad = adj_n.shape[0]
    f_out_pad = w_t.shape[1]
    compute_dtype = adj_n.dtype
    dt_bytes = jnp.dtype(compute_dtype).itemsize
    tm, tk = _pick_tiles(n_pad)
    grid = (n_pad // tm, n_pad // tk)

    # Per-call feature pad/cast is O(N*F_in) -- negligible next to the adjacency.
    feat = jnp.pad(feature.astype(jnp.float32),
                   ((0, n_pad - n), (0, 0))).astype(compute_dtype)

    fin_l = max(f_in, 128)
    vmem_est = (2 * tm * tk * dt_bytes                       # adjacency (dbl-buffered)
                + 2 * tk * fin_l * dt_bytes                  # src features
                + 2 * tm * fin_l * dt_bytes                  # dst features
                + 2 * tm * 128 * 4                           # in-degree norm
                + 2 * 2 * max(f_in, 8) * f_out_pad * dt_bytes  # two weight slabs
                + 2 * 8 * f_out_pad * 4                      # bias
                + 2 * tm * f_out_pad * 4                     # output
                + tm * fin_l * 4)                            # accumulator scratch
    vmem_limit = int(min(max(int(vmem_est * 1.5), 32 * 1024 * 1024),
                         64 * 1024 * 1024))

    cost = pl.CostEstimate(
        flops=2 * n_pad * n_pad * f_in + 2 * 2 * n_pad * f_in * f_out_pad,
        transcendentals=0,
        bytes_accessed=(n_pad * n_pad * dt_bytes
                        + (grid[0] + 1) * n_pad * f_in * dt_bytes
                        + 2 * f_in * f_out_pad * dt_bytes
                        + (n_pad + f_out_pad) * 4
                        + n_pad * f_out_pad * 4),
    )

    out = pl.pallas_call(
        _gcn_kernel,
        out_shape=jax.ShapeDtypeStruct((n_pad, f_out_pad), jnp.float32),
        grid_spec=pltpu.PrefetchScalarGridSpec(
            num_scalar_prefetch=0,
            grid=grid,
            in_specs=[
                pl.BlockSpec((tm, f_in), lambda i, k: (i, 0)),         # dst features
                pl.BlockSpec((tk, f_in), lambda i, k: (k, 0)),         # src features
                pl.BlockSpec((tm, tk), lambda i, k: (i, k)),           # adjacency tile
                pl.BlockSpec((tm, 1), lambda i, k: (i, 0)),            # in-degree norm
                pl.BlockSpec((f_in, f_out_pad), lambda i, k: (0, 0)),  # W_self^T
                pl.BlockSpec((f_in, f_out_pad), lambda i, k: (0, 0)),  # W^T
                pl.BlockSpec((1, f_out_pad), lambda i, k: (0, 0)),     # bias
            ],
            out_specs=pl.BlockSpec((tm, f_out_pad), lambda i, k: (i, 0)),
            scratch_shapes=[pltpu.VMEM((tm, f_in), jnp.float32)],
        ),
        compiler_params=pltpu.CompilerParams(
            dimension_semantics=("parallel", "arbitrary"),
            vmem_limit_bytes=vmem_limit,
        ),
        cost_estimate=cost,
    )(feat, feat, adj_n, in_norm, w_self_t, w_t, b_pad)

    return out[:n, :f_out]


def reference_forward(feature, adj_w, out_deg, in_deg, w_self, w, b,
                      compute_dtype=jnp.float32):
    """Un-fused math mirroring the kernel's operand rounding (compute_dtype)."""
    cd = compute_dtype
    out_norm = jax.lax.rsqrt(jnp.maximum(out_deg.astype(jnp.float32), 1.0))
    in_norm = jax.lax.rsqrt(jnp.maximum(in_deg.astype(jnp.float32), 1.0))
    f = feature.astype(cd).astype(jnp.float32)
    a_n = (adj_w.astype(jnp.float32) * out_norm.reshape(1, -1)
           ).astype(cd).astype(jnp.float32)
    ws = w_self.astype(cd).astype(jnp.float32)
    ww = w.astype(cd).astype(jnp.float32)
    h_s = f @ ws.T
    agg = a_n @ f
    h = ((agg * in_norm).astype(cd).astype(jnp.float32)) @ ww.T + b * in_norm
    return h_s + h


if __name__ == "__main__":
    key = jax.random.PRNGKey(0)
    N, F_in, F_out = 8, 16, 32

    k_feat, k_adj, k_ew, k_ws, k_w, k_b = jax.random.split(key, 6)

    # node features
    feature = jax.random.normal(k_feat, (N, F_in), dtype=jnp.float32)

    # synthetic graph: random binary adjacency mask (dst, src), positive edge weights
    adj_mask = (jax.random.uniform(k_adj, (N, N)) < 0.4).astype(jnp.float32)
    e_w_dense = jax.random.uniform(k_ew, (N, N), minval=0.1, maxval=1.0)
    adj_w = adj_mask * e_w_dense                              # weighted adjacency

    # structural degrees (edge counts -- matches DGL degrees)
    out_deg = jnp.sum(adj_mask, axis=0).reshape(N, 1)         # edges leaving src u
    in_deg = jnp.sum(adj_mask, axis=1).reshape(N, 1)          # edges entering dst v

    # xavier_normal_ with gain = calculate_gain('relu') = sqrt(2)
    gain = float(np.sqrt(2.0))
    std = gain * np.sqrt(2.0 / (F_in + F_out))
    w_self = std * jax.random.normal(k_ws, (F_out, F_in), dtype=jnp.float32)
    w = std * jax.random.normal(k_w, (F_out, F_in), dtype=jnp.float32)
    bound = 1.0 / np.sqrt(F_in)
    b = jax.random.uniform(k_b, (F_out,), minval=-bound, maxval=bound,
                           dtype=jnp.float32)

    # --- float32 operands: tight check against the un-fused math ---
    ws32, wt32, bpad32, f_out_s = prepare_gcn_params(w_self, w, b, jnp.float32)
    adj32, innorm32 = prepare_gcn_graph(adj_w, out_deg, in_deg, jnp.float32)
    h32 = gcn_layer_forward(feature, adj32, innorm32, ws32, wt32, bpad32, f_out_s)
    h32 = jax.block_until_ready(h32)
    ref32 = reference_forward(feature, adj_w, out_deg, in_deg, w_self, w, b)
    np.testing.assert_allclose(np.asarray(h32), np.asarray(ref32),
                               rtol=2e-5, atol=2e-5)

    # --- bf16 operands / f32 accumulation (default, all generations) ---
    ws_bf, wt_bf, bpad_bf, _ = prepare_gcn_params(w_self, w, b, jnp.bfloat16)
    adj_bf, innorm_bf = prepare_gcn_graph(adj_w, out_deg, in_deg, jnp.bfloat16)
    h_bf = gcn_layer_forward(feature, adj_bf, innorm_bf, ws_bf, wt_bf, bpad_bf,
                             f_out_s)
    h_bf = jax.block_until_ready(h_bf)
    ref_bf = reference_forward(feature, adj_w, out_deg, in_deg, w_self, w, b,
                               compute_dtype=jnp.bfloat16)
    np.testing.assert_allclose(np.asarray(h_bf), np.asarray(ref_bf),
                               rtol=2e-2, atol=2e-2)

    # forward returns (h, e_w); e_w is a passthrough of the edge weights
    e_w_out = adj_w[adj_mask.astype(bool)]
    assert h32.shape == (N, F_out)
    print("KERNEL_OK")
</pallas_src>

<mosaic_0001>
module attributes {stable_mosaic.version = 11 : i64} {
  func.func @_gcn_kernel(%arg0: i32, %arg1: i32, %arg2: memref<128x16xf32, #tpu.memory_space<vmem>>, %arg3: memref<128x16xf32, #tpu.memory_space<vmem>>, %arg4: memref<128x128xf32, #tpu.memory_space<vmem>>, %arg5: memref<128x1xf32, #tpu.memory_space<vmem>>, %arg6: memref<16x128xf32, #tpu.memory_space<vmem>>, %arg7: memref<16x128xf32, #tpu.memory_space<vmem>>, %arg8: memref<1x128xf32, #tpu.memory_space<vmem>>, %arg9: memref<128x128xf32, #tpu.memory_space<vmem>>, %arg10: memref<128x16xf32, #tpu.memory_space<vmem>>) attributes {dimension_semantics = [#tpu.dimension_semantics<parallel>, #tpu.dimension_semantics<arbitrary>], iteration_bounds = array<i64: 1, 1>, scalar_prefetch = 0 : i64, scratch_operands = 1 : i64, tpu.core_type = #tpu.core_type<tc>, window_params = [{transform_indices = @transform_0, window_bounds = array<i64: 128, 16>}, {transform_indices = @transform_1, window_bounds = array<i64: 128, 16>}, {transform_indices = @transform_2, window_bounds = array<i64: 128, 128>}, {transform_indices = @transform_3, window_bounds = array<i64: 128, 1>}, {pipeline_mode = #tpu.pipeline_mode<synchronous>, transform_indices = @transform_4, window_bounds = array<i64: 16, 128>}, {pipeline_mode = #tpu.pipeline_mode<synchronous>, transform_indices = @transform_5, window_bounds = array<i64: 16, 128>}, {pipeline_mode = #tpu.pipeline_mode<synchronous>, transform_indices = @transform_6, window_bounds = array<i64: 1, 128>}, {transform_indices = @transform_7, window_bounds = array<i64: 128, 128>}]} {
    %c0_i32 = arith.constant 0 : i32
    %0 = arith.cmpi eq, %arg1, %c0_i32 : i32
    %1 = arith.extui %0 : i1 to i32
    %c0_i32_0 = arith.constant 0 : i32
    %2 = arith.cmpi ne, %1, %c0_i32_0 : i32
    scf.if %2 {
      %cst_10 = arith.constant 0.000000e+00 : f32
      %12 = vector.broadcast %cst_10 : f32 to vector<128x16xf32>
      %c0_11 = arith.constant 0 : index
      %c0_12 = arith.constant 0 : index
      %13 = vector.load %arg10[%c0_11, %c0_12] : memref<128x16xf32, #tpu.memory_space<vmem>>, vector<128x16xf32>
      tpu.vector_store %arg10[%c0_11, %c0_12], %12 {strides = array<i32>} : memref<128x16xf32, #tpu.memory_space<vmem>>, vector<128x16xf32>,
    } else {
    }
    %c0 = arith.constant 0 : index
    %c0_1 = arith.constant 0 : index
    %3 = vector.load %arg10[%c0, %c0_1] : memref<128x16xf32, #tpu.memory_space<vmem>>, vector<128x16xf32>
    %c0_2 = arith.constant 0 : index
    %c0_3 = arith.constant 0 : index
    %4 = vector.load %arg4[%c0_2, %c0_3] : memref<128x128xf32, #tpu.memory_space<vmem>>, vector<128x128xf32>
    %c0_4 = arith.constant 0 : index
    %c0_5 = arith.constant 0 : index
    %5 = vector.load %arg3[%c0_4, %c0_5] : memref<128x16xf32, #tpu.memory_space<vmem>>, vector<128x16xf32>
    %cst = arith.constant dense<0.000000e+00> : vector<128x16xf32>
    %6 = tpu.matmul %4, %5, %cst {dimension_numbers = #tpu.dot_dimension_numbers<[1], [0], [0], [1], [0, 0, 1, 1], [], []>} : vector<128x128xf32>, vector<128x16xf32>, vector<128x16xf32> -> vector<128x16xf32>
    %7 = arith.addf %3, %6 : vector<128x16xf32>
    %c0_6 = arith.constant 0 : index
    %c0_7 = arith.constant 0 : index
    %8 = vector.load %arg10[%c0_6, %c0_7] : memref<128x16xf32, #tpu.memory_space<vmem>>, vector<128x16xf32>
    tpu.vector_store %arg10[%c0_6, %c0_7], %7 {strides = array<i32>} : memref<128x16xf32, #tpu.memory_space<vmem>>, vector<128x16xf32>,
    %c0_i32_8 = arith.constant 0 : i32
    %9 = arith.cmpi eq, %arg1, %c0_i32_8 : i32
    %10 = arith.extui %9 : i1 to i32
    %c0_i32_9 = arith.constant 0 : i32
    %11 = arith.cmpi ne, %10, %c0_i32_9 : i32
    scf.if %11 {
      %c0_10 = arith.constant 0 : index
      %c0_11 = arith.constant 0 : index
      %12 = vector.load %arg5[%c0_10, %c0_11] : memref<128x1xf32, #tpu.memory_space<vmem>>, vector<128x1xf32>
      %c0_12 = arith.constant 0 : index
      %c0_13 = arith.constant 0 : index
      %13 = vector.load %arg2[%c0_12, %c0_13] : memref<128x16xf32, #tpu.memory_space<vmem>>, vector<128x16xf32>
      %c0_14 = arith.constant 0 : index
      %c0_15 = arith.constant 0 : index
      %14 = vector.load %arg6[%c0_14, %c0_15] : memref<16x128xf32, #tpu.memory_space<vmem>>, vector<16x128xf32>
      %cst_16 = arith.constant dense<0.000000e+00> : vector<128x128xf32>
      %15 = tpu.matmul %13, %14, %cst_16 {dimension_numbers = #tpu.dot_dimension_numbers<[1], [0], [0], [1], [0, 0, 1, 1], [], []>} : vector<128x16xf32>, vector<16x128xf32>, vector<128x128xf32> -> vector<128x128xf32>
      %c0_17 = arith.constant 0 : index
      %c0_18 = arith.constant 0 : index
      %16 = vector.load %arg10[%c0_17, %c0_18] : memref<128x16xf32, #tpu.memory_space<vmem>>, vector<128x16xf32>
      %17 = vector.broadcast %12 : vector<128x1xf32> to vector<128x16xf32>
      %18 = arith.mulf %16, %17 : vector<128x16xf32>
      %c0_19 = arith.constant 0 : index
      %c0_20 = arith.constant 0 : index
      %19 = vector.load %arg7[%c0_19, %c0_20] : memref<16x128xf32, #tpu.memory_space<vmem>>, vector<16x128xf32>
      %cst_21 = arith.constant dense<0.000000e+00> : vector<128x128xf32>
      %20 = tpu.matmul %18, %19, %cst_21 {dimension_numbers = #tpu.dot_dimension_numbers<[1], [0], [0], [1], [0, 0, 1, 1], [], []>} : vector<128x16xf32>, vector<16x128xf32>, vector<128x128xf32> -> vector<128x128xf32>
      %21 = arith.addf %15, %20 : vector<128x128xf32>
      %c0_22 = arith.constant 0 : index
      %c0_23 = arith.constant 0 : index
      %22 = vector.load %arg8[%c0_22, %c0_23] : memref<1x128xf32, #tpu.memory_space<vmem>>, vector<1x128xf32>
      %23 = vector.broadcast %22 : vector<1x128xf32> to vector<128x128xf32>
      %24 = vector.broadcast %12 : vector<128x1xf32> to vector<128x128xf32>
      %25 = arith.mulf %23, %24 : vector<128x128xf32>
      %26 = arith.addf %21, %25 : vector<128x128xf32>
      %c0_24 = arith.constant 0 : index
      %c0_25 = arith.constant 0 : index
      %27 = vector.load %arg9[%c0_24, %c0_25] : memref<128x128xf32, #tpu.memory_space<vmem>>, vector<128x128xf32>
      tpu.vector_store %arg9[%c0_24, %c0_25], %26 {strides = array<i32>} : memref<128x128xf32, #tpu.memory_space<vmem>>, vector<128x128xf32>,
    } else {
    }
    return
  }
  func.func @transform_0(%arg0: i32, %arg1: i32) -> (i32, i32) {
    %c0_i32 = arith.constant 0 : i32
    %c0_i32_0 = arith.constant 0 : i32
    return %arg0, %c0_i32 : i32, i32
  }
  func.func @transform_1(%arg0: i32, %arg1: i32) -> (i32, i32) {
    %c0_i32 = arith.constant 0 : i32
    %c0_i32_0 = arith.constant 0 : i32
    return %arg1, %c0_i32 : i32, i32
  }
  func.func @transform_2(%arg0: i32, %arg1: i32) -> (i32, i32) {
    %c0_i32 = arith.constant 0 : i32
    return %arg0, %arg1 : i32, i32
  }
  func.func @transform_3(%arg0: i32, %arg1: i32) -> (i32, i32) {
    %c0_i32 = arith.constant 0 : i32
    %c0_i32_0 = arith.constant 0 : i32
    return %arg0, %c0_i32 : i32, i32
  }
  func.func @transform_4(%arg0: i32, %arg1: i32) -> (i32, i32) {
    %c0_i32 = arith.constant 0 : i32
    %c0_i32_0 = arith.constant 0 : i32
    %c0_i32_1 = arith.constant 0 : i32
    return %c0_i32, %c0_i32_0 : i32, i32
  }
  func.func @transform_5(%arg0: i32, %arg1: i32) -> (i32, i32) {
    %c0_i32 = arith.constant 0 : i32
    %c0_i32_0 = arith.constant 0 : i32
    %c0_i32_1 = arith.constant 0 : i32
    return %c0_i32, %c0_i32_0 : i32, i32
  }
  func.func @transform_6(%arg0: i32, %arg1: i32) -> (i32, i32) {
    %c0_i32 = arith.constant 0 : i32
    %c0_i32_0 = arith.constant 0 : i32
    %c0_i32_1 = arith.constant 0 : i32
    return %c0_i32, %c0_i32_0 : i32, i32
  }
  func.func @transform_7(%arg0: i32, %arg1: i32) -> (i32, i32) {
    %c0_i32 = arith.constant 0 : i32
    %c0_i32_0 = arith.constant 0 : i32
    return %arg0, %c0_i32 : i32, i32
  }
}

</mosaic_0001>

<llo_original>
// kernel: tpu_custom_call.1
$region0: #{tpu_custom_call.1}
  #allocation0 [shape = 'u32[]', space=smem, size = 0x4, offset = 0x4, fixed_abs, tag = 'smem constant byte address 0x4 - core index']
  #allocation1 [shape = 'u32[144,128]{1,0:T(1,128)}', space=vmem, size = 0x12000, scoped, tag = 'internal scratch']
  #allocation2 [shape = 'f32[128,16]{1,0:T(8,128)}', space=vmem, size = 0x10000, scoped, tag = 'scratch operand']
  %s0 = inlined_call_operand.vmem [shape: f32[128,16], index: 0, kind: input, shape index: {}]
  %s1 = inlined_call_operand.vmem [shape: f32[128,16], index: 1, kind: input, shape index: {}]
  %s2 = inlined_call_operand.vmem [shape: f32[128,128], index: 2, kind: input, shape index: {}]
  %s3 = inlined_call_operand.vmem [shape: f32[128,1], index: 3, kind: input, shape index: {}]
  %s4 = inlined_call_operand.vmem [shape: f32[16,128], index: 4, kind: input, shape index: {}]
  %s5 = inlined_call_operand.vmem [shape: f32[16,128], index: 5, kind: input, shape index: {}]
  %s6 = inlined_call_operand.vmem [shape: f32[1,128], index: 6, kind: input, shape index: {}]
  %s7 = inlined_call_operand.hbm [shape: f32[128,128], index: 7, kind: output, shape index: {}]
  %s8 = sld [smem:[#allocation0]]
  $region46: #{tpu_custom_call.1} parent=0
    _
  %s10 = ssub.s32 1, %s8
  %s11 = scalar_select 0, %s10, %s8
  $region1: #{tpu_custom_call.1} parent=0
    #allocation3 [shape = 'u8[65536]{0}', space=vmem, size = 0x10000, scoped, tag = 'output window, operand 0, single buffered']
    #allocation4 [shape = 's32[1]{0}', space=sflag, size = 0x4, scoped, tag = 'scoped memory for tpu_custom_call.1']
    %12 = vsyncpa [#allocation4], 0
    // Predicated region
    $region2: #{tpu_custom_call.1} parent=1 // pred_check
      _
    $region3: #{tpu_custom_call.1} parent=1 // pred_check_branch
      %14 = sbr.rel (0) target = $region5
    $region4: #{tpu_custom_call.1} parent=1 // pred_region
      _
    $region5: #{tpu_custom_call.1} parent=1 // pred_fallthru
      _
    // Predicated region
    $region6: #{tpu_custom_call.1} parent=1 // pred_check
      _
    $region7: #{tpu_custom_call.1} parent=1 // pred_check_branch
      %16 = sbr.rel (0) target = $region9
    $region8: #{tpu_custom_call.1} parent=1 // pred_region
      _
    $region9: #{tpu_custom_call.1} parent=1 // pred_fallthru
      _
    // Predicated region
    $region10: #{tpu_custom_call.1} parent=1 // pred_check
      _
    $region11: #{tpu_custom_call.1} parent=1 // pred_check_branch
      %18 = sbr.rel (0) target = $region13
    $region12: #{tpu_custom_call.1} parent=1 // pred_region
      _
    $region13: #{tpu_custom_call.1} parent=1 // pred_fallthru
      _
    // Predicated region
    $region14: #{tpu_custom_call.1} parent=1 // pred_check
      _
    $region15: #{tpu_custom_call.1} parent=1 // pred_check_branch
      %20 = sbr.rel (0) target = $region17
    $region16: #{tpu_custom_call.1} parent=1 // pred_region
      _
    $region17: #{tpu_custom_call.1} parent=1 // pred_fallthru
      _
    // Predicated region
    $region18: #{tpu_custom_call.1} parent=1 // pred_check
      _
    $region19: #{tpu_custom_call.1} parent=1 // pred_check_branch
      %22 = sbr.rel (0) target = $region21
    $region20: #{tpu_custom_call.1} parent=1 // pred_region
      _
    $region21: #{tpu_custom_call.1} parent=1 // pred_fallthru
      _
    // Predicated region
    $region22: #{tpu_custom_call.1} parent=1 // pred_check
      _
    $region23: #{tpu_custom_call.1} parent=1 // pred_check_branch
      %24 = sbr.rel (0) target = $region25
    $region24: #{tpu_custom_call.1} parent=1 // pred_region
      _
    $region25: #{tpu_custom_call.1} parent=1 // pred_fallthru
      _
    // Predicated region
    $region26: #{tpu_custom_call.1} parent=1 // pred_check
      _
    $region27: #{tpu_custom_call.1} parent=1 // pred_check_branch
      %26 = sbr.rel (0) target = $region29
    $region28: #{tpu_custom_call.1} parent=1 // pred_region
      _
    $region29: #{tpu_custom_call.1} parent=1 // pred_fallthru
      _
    %p27 = scmp.eq.s32.totalorder 0, 0
    // Predicated region
    $region30: #{tpu_custom_call.1} parent=1 // pred_check
      %p28 = pneg %p27
    $region31: #{tpu_custom_call.1} parent=1 // pred_check_branch
      %30 = sbr.rel (%p28) target = $region33
    $region32: #{tpu_custom_call.1} parent=1 // pred_region
      %vm31 = vcmask 130048
      %32 = vst.msk [vmem:[#allocation2] sm:$0xff] %vm31, 0.0
      %33 = vst.msk [vmem:[#allocation2 + $0x8] sm:$0xff] %vm31, 0.0
      %34 = vst.msk [vmem:[#allocation2 + $0x10] sm:$0xff] %vm31, 0.0
      %35 = vst.msk [vmem:[#allocation2 + $0x18] sm:$0xff] %vm31, 0.0
      %36 = vst.msk [vmem:[#allocation2 + $0x20] sm:$0xff] %vm31, 0.0
      %37 = vst.msk [vmem:[#allocation2 + $0x28] sm:$0xff] %vm31, 0.0
      %38 = vst.msk [vmem:[#allocation2 + $0x30] sm:$0xff] %vm31, 0.0
      %39 = vst.msk [vmem:[#allocation2 + $0x38] sm:$0xff] %vm31, 0.0
      %40 = vst.msk [vmem:[#allocation2 + $0x40] sm:$0xff] %vm31, 0.0
      %41 = vst.msk [vmem:[#allocation2 + $0x48] sm:$0xff] %vm31, 0.0
      %42 = vst.msk [vmem:[#allocation2 + $0x50] sm:$0xff] %vm31, 0.0
      %43 = vst.msk [vmem:[#allocation2 + $0x58] sm:$0xff] %vm31, 0.0
      %44 = vst.msk [vmem:[#allocation2 + $0x60] sm:$0xff] %vm31, 0.0
      %45 = vst.msk [vmem:[#allocation2 + $0x68] sm:$0xff] %vm31, 0.0
      %46 = vst.msk [vmem:[#allocation2 + $0x70] sm:$0xff] %vm31, 0.0
      %47 = vst.msk [vmem:[#allocation2 + $0x78] sm:$0xff] %vm31, 0.0
    $region33: #{tpu_custom_call.1} parent=1 // pred_fallthru
      _
    %v48 = vld [vmem:[#allocation2] sm:$0xff]
    %v49 = vld [vmem:[#allocation2 + $0x8] sm:$0xff]
    %v50 = vld [vmem:[#allocation2 + $0x10] sm:$0xff]
    %v51 = vld [vmem:[#allocation2 + $0x18] sm:$0xff]
    %v52 = vld [vmem:[#allocation2 + $0x20] sm:$0xff]
    %v53 = vld [vmem:[#allocation2 + $0x28] sm:$0xff]
    %v54 = vld [vmem:[#allocation2 + $0x30] sm:$0xff]
    %v55 = vld [vmem:[#allocation2 + $0x38] sm:$0xff]
    %v56 = vld [vmem:[#allocation2 + $0x40] sm:$0xff]
    %v57 = vld [vmem:[#allocation2 + $0x48] sm:$0xff]
    %v58 = vld [vmem:[#allocation2 + $0x50] sm:$0xff]
    %v59 = vld [vmem:[#allocation2 + $0x58] sm:$0xff]
    %v60 = vld [vmem:[#allocation2 + $0x60] sm:$0xff]
    %v61 = vld [vmem:[#allocation2 + $0x68] sm:$0xff]
    %v62 = vld [vmem:[#allocation2 + $0x70] sm:$0xff]
    %v63 = vld [vmem:[#allocation2 + $0x78] sm:$0xff]
    %v64 = vld [vmem:[%s2] sm:$0xff]
    %v65 = vld [vmem:[%s2 + $0x8] sm:$0xff]
    %v66 = vld [vmem:[%s2 + $0x10] sm:$0xff]
    %v67 = vld [vmem:[%s2 + $0x18] sm:$0xff]
    %v68 = vld [vmem:[%s2 + $0x20] sm:$0xff]
    %v69 = vld [vmem:[%s2 + $0x28] sm:$0xff]
    %v70 = vld [vmem:[%s2 + $0x30] sm:$0xff]
    %v71 = vld [vmem:[%s2 + $0x38] sm:$0xff]
    %v72 = vld [vmem:[%s2 + $0x40] sm:$0xff]
    %v73 = vld [vmem:[%s2 + $0x48] sm:$0xff]
    %v74 = vld [vmem:[%s2 + $0x50] sm:$0xff]
    %v75 = vld [vmem:[%s2 + $0x58] sm:$0xff]
    %v76 = vld [vmem:[%s2 + $0x60] sm:$0xff]
    %v77 = vld [vmem:[%s2 + $0x68] sm:$0xff]
    %v78 = vld [vmem:[%s2 + $0x70] sm:$0xff]
    %v79 = vld [vmem:[%s2 + $0x78] sm:$0xff]
    %v80 = vld [vmem:[%s1] sm:$0xff]
    %v81 = vld [vmem:[%s1 + $0x8] sm:$0xff]
    %v82 = vld [vmem:[%s1 + $0x10] sm:$0xff]
    %v83 = vld [vmem:[%s1 + $0x18] sm:$0xff]
    %v84 = vld [vmem:[%s1 + $0x20] sm:$0xff]
    %v85 = vld [vmem:[%s1 + $0x28] sm:$0xff]
    %v86 = vld [vmem:[%s1 + $0x30] sm:$0xff]
    %v87 = vld [vmem:[%s1 + $0x38] sm:$0xff]
    %v88 = vld [vmem:[%s1 + $0x40] sm:$0xff]
    %v89 = vld [vmem:[%s1 + $0x48] sm:$0xff]
    %v90 = vld [vmem:[%s1 + $0x50] sm:$0xff]
    %v91 = vld [vmem:[%s1 + $0x58] sm:$0xff]
    %v92 = vld [vmem:[%s1 + $0x60] sm:$0xff]
    %v93 = vld [vmem:[%s1 + $0x68] sm:$0xff]
    %v94 = vld [vmem:[%s1 + $0x70] sm:$0xff]
    %v95 = vld [vmem:[%s1 + $0x78] sm:$0xff]
    %96 = vmatprep.subr.mxu0 0.0
    %97 = vmatpush1.msra.mxu0 %v95
    %98 = vmatprep.subr.mxu0 0.0
    %99 = vmatpush1.msra.mxu0 %v94
    %100 = vmatprep.subr.mxu0 0.0
    %101 = vmatpush1.msra.mxu0 %v93
    %102 = vmatprep.subr.mxu0 0.0
    %103 = vmatpush1.msra.mxu0 %v92
    %104 = vmatprep.subr.mxu0 0.0
    %105 = vmatpush1.msra.mxu0 %v91
    %106 = vmatprep.subr.mxu0 0.0
    %107 = vmatpush1.msra.mxu0 %v90
    %108 = vmatprep.subr.mxu0 0.0
    %109 = vmatpush1.msra.mxu0 %v89
    %110 = vmatprep.subr.mxu0 0.0
    %111 = vmatpush1.msra.mxu0 %v88
    %112 = vmatprep.subr.mxu0 0.0
    %113 = vmatpush1.msra.mxu0 %v87
    %114 = vmatprep.subr.mxu0 0.0
    %115 = vmatpush1.msra.mxu0 %v86
    %116 = vmatprep.subr.mxu0 0.0
    %117 = vmatpush1.msra.mxu0 %v85
    %118 = vmatprep.subr.mxu0 0.0
    %119 = vmatpush1.msra.mxu0 %v84
    %120 = vmatprep.subr.mxu0 0.0
    %121 = vmatpush1.msra.mxu0 %v83
    %122 = vmatprep.subr.mxu0 0.0
    %123 = vmatpush1.msra.mxu0 %v82
    %124 = vmatprep.subr.mxu0 0.0
    %125 = vmatpush1.msra.mxu0 %v81
    %126 = vmatprep.subr.mxu0 0.0
    %127 = vmatpush1.msra.mxu0 %v80
    %128 = vmatprep.subr.mxu0 0.0
    %129 = vmatpush2.msra.mxu0 0.0
    %130 = vmatprep.subr.mxu0 0.0
    %131 = vmatpush2.msra.mxu0 0.0
    %132 = vmatprep.subr.mxu0 0.0
    %133 = vmatpush2.msra.mxu0 0.0
    %134 = vmatprep.subr.mxu0 0.0
    %135 = vmatpush2.msra.mxu0 0.0
    %136 = vmatprep.subr.mxu0 0.0
    %137 = vmatpush2.msra.mxu0 0.0
    %138 = vmatprep.subr.mxu0 0.0
    %139 = vmatpush2.msra.mxu0 0.0
    %140 = vmatprep.subr.mxu0 0.0
    %141 = vmatpush2.msra.mxu0 0.0
    %142 = vmatprep.subr.mxu0 0.0
    %143 = vmatpush2.msra.mxu0 0.0
    %144 = vmatprep.subr.mxu0 0.0
    %145 = vmatpush2.msra.mxu0 0.0
    %146 = vmatprep.subr.mxu0 0.0
    %147 = vmatpush2.msra.mxu0 0.0
    %148 = vmatprep.subr.mxu0 0.0
    %149 = vmatpush2.msra.mxu0 0.0
    %150 = vmatprep.subr.mxu0 0.0
    %151 = vmatpush2.msra.mxu0 0.0
    %152 = vmatprep.subr.mxu0 0.0
    %153 = vmatpush2.msra.mxu0 0.0
    %154 = vmatprep.subr.mxu0 0.0
    %155 = vmatpush2.msra.mxu0 0.0
    %156 = vmatprep.subr.mxu0 0.0
    %157 = vmatpush2.msra.mxu0 0.0
    %158 = vmatprep.subr.mxu0 0.0
    %159 = vmatpush2.msra.mxu0 0.0
    %160 = vmatprep.mubr.f32.mxu0 0.0
    %161 = vmatmul.mubr.f32.gmra.mxu0 %v64
    %v162 = vpop.f32.mrf.mxu0
    %v163 = vadd.f32 0.0, %v162
    %v164 = vpop.f32.mrf.mxu0
    %165 = vmatprep.mubr.f32.mxu0 0.0
    %166 = vmatmul.mubr.f32.gmra.mxu0 %v65
    %v167 = vpop.f32.mrf.mxu0
    %v168 = vadd.f32 0.0, %v167
    %v169 = vpop.f32.mrf.mxu0
    %170 = vmatprep.mubr.f32.mxu0 0.0
    %171 = vmatmul.mubr.f32.gmra.mxu0 %v66
    %v172 = vpop.f32.mrf.mxu0
    %v173 = vadd.f32 0.0, %v172
    %v174 = vpop.f32.mrf.mxu0
    %175 = vmatprep.mubr.f32.mxu0 0.0
    %176 = vmatmul.mubr.f32.gmra.mxu0 %v67
    %v177 = vpop.f32.mrf.mxu0
    %v178 = vadd.f32 0.0, %v177
    %v179 = vpop.f32.mrf.mxu0
    %180 = vmatprep.mubr.f32.mxu0 0.0
    %181 = vmatmul.mubr.f32.gmra.mxu0 %v68
    %v182 = vpop.f32.mrf.mxu0
    %v183 = vadd.f32 0.0, %v182
    %v184 = vpop.f32.mrf.mxu0
    %185 = vmatprep.mubr.f32.mxu0 0.0
    %186 = vmatmul.mubr.f32.gmra.mxu0 %v69
    %v187 = vpop.f32.mrf.mxu0
    %v188 = vadd.f32 0.0, %v187
    %v189 = vpop.f32.mrf.mxu0
    %190 = vmatprep.mubr.f32.mxu0 0.0
    %191 = vmatmul.mubr.f32.gmra.mxu0 %v70
    %v192 = vpop.f32.mrf.mxu0
    %v193 = vadd.f32 0.0, %v192
    %v194 = vpop.f32.mrf.mxu0
    %195 = vmatprep.mubr.f32.mxu0 0.0
    %196 = vmatmul.mubr.f32.gmra.mxu0 %v71
    %v197 = vpop.f32.mrf.mxu0
    %v198 = vadd.f32 0.0, %v197
    %v199 = vpop.f32.mrf.mxu0
    %200 = vmatprep.mubr.f32.mxu0 0.0
    %201 = vmatmul.mubr.f32.gmra.mxu0 %v72
    %v202 = vpop.f32.mrf.mxu0
    %v203 = vadd.f32 0.0, %v202
    %v204 = vpop.f32.mrf.mxu0
    %205 = vmatprep.mubr.f32.mxu0 0.0
    %206 = vmatmul.mubr.f32.gmra.mxu0 %v73
    %v207 = vpop.f32.mrf.mxu0
    %v208 = vadd.f32 0.0, %v207
    %v209 = vpop.f32.mrf.mxu0
    %210 = vmatprep.mubr.f32.mxu0 0.0
    %211 = vmatmul.mubr.f32.gmra.mxu0 %v74
    %v212 = vpop.f32.mrf.mxu0
    %v213 = vadd.f32 0.0, %v212
    %v214 = vpop.f32.mrf.mxu0
    %215 = vmatprep.mubr.f32.mxu0 0.0
    %216 = vmatmul.mubr.f32.gmra.mxu0 %v75
    %v217 = vpop.f32.mrf.mxu0
    %v218 = vadd.f32 0.0, %v217
    %v219 = vpop.f32.mrf.mxu0
    %220 = vmatprep.mubr.f32.mxu0 0.0
    %221 = vmatmul.mubr.f32.gmra.mxu0 %v76
    %v222 = vpop.f32.mrf.mxu0
    %v223 = vadd.f32 0.0, %v222
    %v224 = vpop.f32.mrf.mxu0
    %225 = vmatprep.mubr.f32.mxu0 0.0
    %226 = vmatmul.mubr.f32.gmra.mxu0 %v77
    %v227 = vpop.f32.mrf.mxu0
    %v228 = vadd.f32 0.0, %v227
    %v229 = vpop.f32.mrf.mxu0
    %230 = vmatprep.mubr.f32.mxu0 0.0
    %231 = vmatmul.mubr.f32.gmra.mxu0 %v78
    %v232 = vpop.f32.mrf.mxu0
    %v233 = vadd.f32 0.0, %v232
    %v234 = vpop.f32.mrf.mxu0
    %235 = vmatprep.mubr.f32.mxu0 0.0
    %236 = vmatmul.mubr.f32.gmra.mxu0 %v79
    %v237 = vpop.f32.mrf.mxu0
    %v238 = vadd.f32 0.0, %v237
    %v239 = vpop.f32.mrf.mxu0
    %240 = vdwg.mxu0
    %v241 = vadd.f32 %v48, %v163
    %v242 = vadd.f32 %v49, %v168
    %v243 = vadd.f32 %v50, %v173
    %v244 = vadd.f32 %v51, %v178
    %v245 = vadd.f32 %v52, %v183
    %v246 = vadd.f32 %v53, %v188
    %v247 = vadd.f32 %v54, %v193
    %v248 = vadd.f32 %v55, %v198
    %v249 = vadd.f32 %v56, %v203
    %v250 = vadd.f32 %v57, %v208
    %v251 = vadd.f32 %v58, %v213
    %v252 = vadd.f32 %v59, %v218
    %v253 = vadd.f32 %v60, %v223
    %v254 = vadd.f32 %v61, %v228
    %v255 = vadd.f32 %v62, %v233
    %v256 = vadd.f32 %v63, %v238
    %vm257 = vcmask 130048
    %258 = vst.msk [vmem:[#allocation2] sm:$0xff] %vm257, %v241
    %259 = vst.msk [vmem:[#allocation2 + $0x8] sm:$0xff] %vm257, %v242
    %260 = vst.msk [vmem:[#allocation2 + $0x10] sm:$0xff] %vm257, %v243
    %261 = vst.msk [vmem:[#allocation2 + $0x18] sm:$0xff] %vm257, %v244
    %262 = vst.msk [vmem:[#allocation2 + $0x20] sm:$0xff] %vm257, %v245
    %263 = vst.msk [vmem:[#allocation2 + $0x28] sm:$0xff] %vm257, %v246
    %264 = vst.msk [vmem:[#allocation2 + $0x30] sm:$0xff] %vm257, %v247
    %265 = vst.msk [vmem:[#allocation2 + $0x38] sm:$0xff] %vm257, %v248
    %266 = vst.msk [vmem:[#allocation2 + $0x40] sm:$0xff] %vm257, %v249
    %267 = vst.msk [vmem:[#allocation2 + $0x48] sm:$0xff] %vm257, %v250
    %268 = vst.msk [vmem:[#allocation2 + $0x50] sm:$0xff] %vm257, %v251
    %269 = vst.msk [vmem:[#allocation2 + $0x58] sm:$0xff] %vm257, %v252
    %270 = vst.msk [vmem:[#allocation2 + $0x60] sm:$0xff] %vm257, %v253
    %271 = vst.msk [vmem:[#allocation2 + $0x68] sm:$0xff] %vm257, %v254
    %272 = vst.msk [vmem:[#allocation2 + $0x70] sm:$0xff] %vm257, %v255
    %273 = vst.msk [vmem:[#allocation2 + $0x78] sm:$0xff] %vm257, %v256
    // Predicated region
    $region34: #{tpu_custom_call.1} parent=1 // pred_check
      %p274 = pneg %p27
    $region35: #{tpu_custom_call.1} parent=1 // pred_check_branch
      %276 = sbr.rel (%p274) target = $region37
    $region36: #{tpu_custom_call.1} parent=1 // pred_region
      %v277 = vld [vmem:[%s3] sm:$0xff]
      %v278 = vld [vmem:[%s3 + $0x8] sm:$0xff]
      %v279 = vld [vmem:[%s3 + $0x10] sm:$0xff]
      %v280 = vld [vmem:[%s3 + $0x18] sm:$0xff]
      %v281 = vld [vmem:[%s3 + $0x20] sm:$0xff]
      %v282 = vld [vmem:[%s3 + $0x28] sm:$0xff]
      %v283 = vld [vmem:[%s3 + $0x30] sm:$0xff]
      %v284 = vld [vmem:[%s3 + $0x38] sm:$0xff]
      %v285 = vld [vmem:[%s3 + $0x40] sm:$0xff]
      %v286 = vld [vmem:[%s3 + $0x48] sm:$0xff]
      %v287 = vld [vmem:[%s3 + $0x50] sm:$0xff]
      %v288 = vld [vmem:[%s3 + $0x58] sm:$0xff]
      %v289 = vld [vmem:[%s3 + $0x60] sm:$0xff]
      %v290 = vld [vmem:[%s3 + $0x68] sm:$0xff]
      %v291 = vld [vmem:[%s3 + $0x70] sm:$0xff]
      %v292 = vld [vmem:[%s3 + $0x78] sm:$0xff]
      %v293 = vld [vmem:[%s0] sm:$0xff]
      %v294 = vld [vmem:[%s0 + $0x8] sm:$0xff]
      %v295 = vld [vmem:[%s0 + $0x10] sm:$0xff]
      %v296 = vld [vmem:[%s0 + $0x18] sm:$0xff]
      %v297 = vld [vmem:[%s0 + $0x20] sm:$0xff]
      %v298 = vld [vmem:[%s0 + $0x28] sm:$0xff]
      %v299 = vld [vmem:[%s0 + $0x30] sm:$0xff]
      %v300 = vld [vmem:[%s0 + $0x38] sm:$0xff]
      %v301 = vld [vmem:[%s0 + $0x40] sm:$0xff]
      %v302 = vld [vmem:[%s0 + $0x48] sm:$0xff]
      %v303 = vld [vmem:[%s0 + $0x50] sm:$0xff]
      %v304 = vld [vmem:[%s0 + $0x58] sm:$0xff]
      %v305 = vld [vmem:[%s0 + $0x60] sm:$0xff]
      %v306 = vld [vmem:[%s0 + $0x68] sm:$0xff]
      %v307 = vld [vmem:[%s0 + $0x70] sm:$0xff]
      %v308 = vld [vmem:[%s0 + $0x78] sm:$0xff]
      %v309 = vld [vmem:[%s4] sm:$0xff]
      %v310 = vld [vmem:[%s4 + $0x8] sm:$0xff]
      %v311 = vld [vmem:[#allocation2] sm:$0xff]
      %v312 = vld [vmem:[#allocation2 + $0x8] sm:$0xff]
      %v313 = vld [vmem:[#allocation2 + $0x10] sm:$0xff]
      %v314 = vld [vmem:[#allocation2 + $0x18] sm:$0xff]
      %v315 = vld [vmem:[#allocation2 + $0x20] sm:$0xff]
      %v316 = vld [vmem:[#allocation2 + $0x28] sm:$0xff]
      %v317 = vld [vmem:[#allocation2 + $0x30] sm:$0xff]
      %v318 = vld [vmem:[#allocation2 + $0x38] sm:$0xff]
      %v319 = vld [vmem:[#allocation2 + $0x40] sm:$0xff]
      %v320 = vld [vmem:[#allocation2 + $0x48] sm:$0xff]
      %v321 = vld [vmem:[#allocation2 + $0x50] sm:$0xff]
      %v322 = vld [vmem:[#allocation2 + $0x58] sm:$0xff]
      %v323 = vld [vmem:[#allocation2 + $0x60] sm:$0xff]
      %v324 = vld [vmem:[#allocation2 + $0x68] sm:$0xff]
      %v325 = vld [vmem:[#allocation2 + $0x70] sm:$0xff]
      %v326 = vld [vmem:[#allocation2 + $0x78] sm:$0xff]
      %328 = vset.pattern.permute.xlu0 0
      %329 = vperm.xlu0 %328, %v277
      %v330 = vpop.permute.xlu0 %329
      %333 = vset.pattern.permute.xlu0 0
      %334 = vperm.xlu0 %333, %v278
      %v335 = vpop.permute.xlu0 %334
      %338 = vset.pattern.permute.xlu0 0
      %339 = vperm.xlu0 %338, %v279
      %v340 = vpop.permute.xlu0 %339
      %343 = vset.pattern.permute.xlu0 0
      %344 = vperm.xlu0 %343, %v280
      %v345 = vpop.permute.xlu0 %344
      %348 = vset.pattern.permute.xlu0 0
      %349 = vperm.xlu0 %348, %v281
      %v350 = vpop.permute.xlu0 %349
      %353 = vset.pattern.permute.xlu0 0
      %354 = vperm.xlu0 %353, %v282
      %v355 = vpop.permute.xlu0 %354
      %358 = vset.pattern.permute.xlu0 0
      %359 = vperm.xlu0 %358, %v283
      %v360 = vpop.permute.xlu0 %359
      %363 = vset.pattern.permute.xlu0 0
      %364 = vperm.xlu0 %363, %v284
      %v365 = vpop.permute.xlu0 %364
      %368 = vset.pattern.permute.xlu0 0
      %369 = vperm.xlu0 %368, %v285
      %v370 = vpop.permute.xlu0 %369
      %373 = vset.pattern.permute.xlu0 0
      %374 = vperm.xlu0 %373, %v286
      %v375 = vpop.permute.xlu0 %374
      %378 = vset.pattern.permute.xlu0 0
      %379 = vperm.xlu0 %378, %v287
      %v380 = vpop.permute.xlu0 %379
      %383 = vset.pattern.permute.xlu0 0
      %384 = vperm.xlu0 %383, %v288
      %v385 = vpop.permute.xlu0 %384
      %388 = vset.pattern.permute.xlu0 0
      %389 = vperm.xlu0 %388, %v289
      %v390 = vpop.permute.xlu0 %389
      %393 = vset.pattern.permute.xlu0 0
      %394 = vperm.xlu0 %393, %v290
      %v395 = vpop.permute.xlu0 %394
      %398 = vset.pattern.permute.xlu0 0
      %399 = vperm.xlu0 %398, %v291
      %v400 = vpop.permute.xlu0 %399
      %403 = vset.pattern.permute.xlu0 0
      %404 = vperm.xlu0 %403, %v292
      %v405 = vpop.permute.xlu0 %404
      %v407 = vmul.f32 %v311, %v330
      %v408 = vmul.f32 %v312, %v335
      %v409 = vmul.f32 %v313, %v340
      %v410 = vmul.f32 %v314, %v345
      %v411 = vmul.f32 %v315, %v350
      %v412 = vmul.f32 %v316, %v355
      %v413 = vmul.f32 %v317, %v360
      %v414 = vmul.f32 %v318, %v365
      %v415 = vmul.f32 %v319, %v370
      %v416 = vmul.f32 %v320, %v375
      %v417 = vmul.f32 %v321, %v380
      %v418 = vmul.f32 %v322, %v385
      %v419 = vmul.f32 %v323, %v390
      %v420 = vmul.f32 %v324, %v395
      %v421 = vmul.f32 %v325, %v400
      %v422 = vmul.f32 %v326, %v405
      %v423 = vld [vmem:[%s5] sm:$0xff]
      %v424 = vld [vmem:[%s5 + $0x8] sm:$0xff]
      %v426 = vsel %vm257, %v407, 0
      %v429 = vsel %vm257, %v408, 0
      %v432 = vsel %vm257, %v409, 0
      %v435 = vsel %vm257, %v410, 0
      %v438 = vsel %vm257, %v411, 0
      %v441 = vsel %vm257, %v412, 0
      %v444 = vsel %vm257, %v413, 0
      %v447 = vsel %vm257, %v414, 0
      %v450 = vsel %vm257, %v415, 0
      %v453 = vsel %vm257, %v416, 0
      %v456 = vsel %vm257, %v417, 0
      %v459 = vsel %vm257, %v418, 0
      %v462 = vsel %vm257, %v419, 0
      %v465 = vsel %vm257, %v420, 0
      %v468 = vsel %vm257, %v421, 0
      %v471 = vsel %vm257, %v422, 0
      %473 = vmatprep.subr.mxu0 0.0
      %474 = vmatpush1.msra.mxu0 0.0
      %475 = vmatprep.subr.mxu0 0.0
      %476 = vmatpush1.msra.mxu0 0.0
      %477 = vmatprep.subr.mxu0 0.0
      %478 = vmatpush1.msra.mxu0 0.0
      %479 = vmatprep.subr.mxu0 0.0
      %480 = vmatpush1.msra.mxu0 0.0
      %481 = vmatprep.subr.mxu0 0.0
      %482 = vmatpush1.msra.mxu0 0.0
      %483 = vmatprep.subr.mxu0 0.0
      %484 = vmatpush1.msra.mxu0 0.0
      %485 = vmatprep.subr.mxu0 0.0
      %486 = vmatpush1.msra.mxu0 0.0
      %487 = vmatprep.subr.mxu0 0.0
      %488 = vmatpush1.msra.mxu0 0.0
      %489 = vmatprep.subr.mxu0 0.0
      %490 = vmatpush1.msra.mxu0 0.0
      %491 = vmatprep.subr.mxu0 0.0
      %492 = vmatpush1.msra.mxu0 0.0
      %493 = vmatprep.subr.mxu0 0.0
      %494 = vmatpush1.msra.mxu0 0.0
      %495 = vmatprep.subr.mxu0 0.0
      %496 = vmatpush1.msra.mxu0 0.0
      %497 = vmatprep.subr.mxu0 0.0
      %498 = vmatpush1.msra.mxu0 0.0
      %499 = vmatprep.subr.mxu0 0.0
      %500 = vmatpush1.msra.mxu0 0.0
      %501 = vmatprep.subr.mxu0 0.0
      %502 = vmatpush1.msra.mxu0 %v424
      %503 = vmatprep.subr.mxu0 0.0
      %504 = vmatpush1.msra.mxu0 %v423
      %505 = vmatprep.subr.mxu0 0.0
      %506 = vmatpush2.msra.mxu0 0.0
      %507 = vmatprep.subr.mxu0 0.0
      %508 = vmatpush2.msra.mxu0 0.0
      %509 = vmatprep.subr.mxu0 0.0
      %510 = vmatpush2.msra.mxu0 0.0
      %511 = vmatprep.subr.mxu0 0.0
      %512 = vmatpush2.msra.mxu0 0.0
      %513 = vmatprep.subr.mxu0 0.0
      %514 = vmatpush2.msra.mxu0 0.0
      %515 = vmatprep.subr.mxu0 0.0
      %516 = vmatpush2.msra.mxu0 0.0
      %517 = vmatprep.subr.mxu0 0.0
      %518 = vmatpush2.msra.mxu0 0.0
      %519 = vmatprep.subr.mxu0 0.0
      %520 = vmatpush2.msra.mxu0 0.0
      %521 = vmatprep.subr.mxu0 0.0
      %522 = vmatpush2.msra.mxu0 0.0
      %523 = vmatprep.subr.mxu0 0.0
      %524 = vmatpush2.msra.mxu0 0.0
      %525 = vmatprep.subr.mxu0 0.0
      %526 = vmatpush2.msra.mxu0 0.0
      %527 = vmatprep.subr.mxu0 0.0
      %528 = vmatpush2.msra.mxu0 0.0
      %529 = vmatprep.subr.mxu0 0.0
      %530 = vmatpush2.msra.mxu0 0.0
      %531 = vmatprep.subr.mxu0 0.0
      %532 = vmatpush2.msra.mxu0 0.0
      %533 = vmatprep.subr.mxu0 0.0
      %534 = vmatpush2.msra.mxu0 0.0
      %535 = vmatprep.subr.mxu0 0.0
      %536 = vmatpush2.msra.mxu0 0.0
      %537 = vmatprep.mubr.f32.mxu0 0.0
      %538 = vmatmul.mubr.f32.gmra.mxu0 %v426
      %v539 = vpop.f32.mrf.mxu0
      %v540 = vadd.f32 0.0, %v539
      %v541 = vpop.f32.mrf.mxu0
      %542 = vmatprep.mubr.f32.mxu0 0.0
      %543 = vmatmul.mubr.f32.gmra.mxu0 %v429
      %v544 = vpop.f32.mrf.mxu0
      %v545 = vadd.f32 0.0, %v544
      %v546 = vpop.f32.mrf.mxu0
      %547 = vmatprep.mubr.f32.mxu0 0.0
      %548 = vmatmul.mubr.f32.gmra.mxu0 %v432
      %v549 = vpop.f32.mrf.mxu0
      %v550 = vadd.f32 0.0, %v549
      %v551 = vpop.f32.mrf.mxu0
      %552 = vmatprep.mubr.f32.mxu0 0.0
      %553 = vmatmul.mubr.f32.gmra.mxu0 %v435
      %v554 = vpop.f32.mrf.mxu0
      %v555 = vadd.f32 0.0, %v554
      %v556 = vpop.f32.mrf.mxu0
      %557 = vmatprep.mubr.f32.mxu0 0.0
      %558 = vmatmul.mubr.f32.gmra.mxu0 %v438
      %v559 = vpop.f32.mrf.mxu0
      %v560 = vadd.f32 0.0, %v559
      %v561 = vpop.f32.mrf.mxu0
      %562 = vmatprep.mubr.f32.mxu0 0.0
      %563 = vmatmul.mubr.f32.gmra.mxu0 %v441
      %v564 = vpop.f32.mrf.mxu0
      %v565 = vadd.f32 0.0, %v564
      %v566 = vpop.f32.mrf.mxu0
      %567 = vmatprep.mubr.f32.mxu0 0.0
      %568 = vmatmul.mubr.f32.gmra.mxu0 %v444
      %v569 = vpop.f32.mrf.mxu0
      %v570 = vadd.f32 0.0, %v569
      %v571 = vpop.f32.mrf.mxu0
      %572 = vmatprep.mubr.f32.mxu0 0.0
      %573 = vmatmul.mubr.f32.gmra.mxu0 %v447
      %v574 = vpop.f32.mrf.mxu0
      %v575 = vadd.f32 0.0, %v574
      %v576 = vpop.f32.mrf.mxu0
      %577 = vmatprep.mubr.f32.mxu0 0.0
      %578 = vmatmul.mubr.f32.gmra.mxu0 %v450
      %v579 = vpop.f32.mrf.mxu0
      %v580 = vadd.f32 0.0, %v579
      %v581 = vpop.f32.mrf.mxu0
      %582 = vmatprep.mubr.f32.mxu0 0.0
      %583 = vmatmul.mubr.f32.gmra.mxu0 %v453
      %v584 = vpop.f32.mrf.mxu0
      %v585 = vadd.f32 0.0, %v584
      %v586 = vpop.f32.mrf.mxu0
      %587 = vmatprep.mubr.f32.mxu0 0.0
      %588 = vmatmul.mubr.f32.gmra.mxu0 %v456
      %v589 = vpop.f32.mrf.mxu0
      %v590 = vadd.f32 0.0, %v589
      %v591 = vpop.f32.mrf.mxu0
      %592 = vmatprep.mubr.f32.mxu0 0.0
      %593 = vmatmul.mubr.f32.gmra.mxu0 %v459
      %v594 = vpop.f32.mrf.mxu0
      %v595 = vadd.f32 0.0, %v594
      %v596 = vpop.f32.mrf.mxu0
      %597 = vmatprep.mubr.f32.mxu0 0.0
      %598 = vmatmul.mubr.f32.gmra.mxu0 %v462
      %v599 = vpop.f32.mrf.mxu0
      %v600 = vadd.f32 0.0, %v599
      %v601 = vpop.f32.mrf.mxu0
      %602 = vmatprep.mubr.f32.mxu0 0.0
      %603 = vmatmul.mubr.f32.gmra.mxu0 %v465
      %v604 = vpop.f32.mrf.mxu0
      %v605 = vadd.f32 0.0, %v604
      %v606 = vpop.f32.mrf.mxu0
      %607 = vmatprep.mubr.f32.mxu0 0.0
      %608 = vmatmul.mubr.f32.gmra.mxu0 %v468
      %v609 = vpop.f32.mrf.mxu0
      %v610 = vadd.f32 0.0, %v609
      %v611 = vpop.f32.mrf.mxu0
      %612 = vmatprep.mubr.f32.mxu0 0.0
      %613 = vmatmul.mubr.f32.gmra.mxu0 %v471
      %v614 = vpop.f32.mrf.mxu0
      %v615 = vadd.f32 0.0, %v614
      %v616 = vpop.f32.mrf.mxu0
      %617 = vdwg.mxu0
      %v619 = vsel %vm257, %v293, 0
      %v622 = vsel %vm257, %v294, 0
      %v625 = vsel %vm257, %v295, 0
      %v628 = vsel %vm257, %v296, 0
      %v631 = vsel %vm257, %v297, 0
      %v634 = vsel %vm257, %v298, 0
      %v637 = vsel %vm257, %v299, 0
      %v640 = vsel %vm257, %v300, 0
      %v643 = vsel %vm257, %v301, 0
      %v646 = vsel %vm257, %v302, 0
      %v649 = vsel %vm257, %v303, 0
      %v652 = vsel %vm257, %v304, 0
      %v655 = vsel %vm257, %v305, 0
      %v658 = vsel %vm257, %v306, 0
      %v661 = vsel %vm257, %v307, 0
      %v664 = vsel %vm257, %v308, 0
      %666 = vmatprep.subr.mxu0 0.0
      %667 = vmatpush1.msra.mxu0 0.0
      %668 = vmatprep.subr.mxu0 0.0
      %669 = vmatpush1.msra.mxu0 0.0
      %670 = vmatprep.subr.mxu0 0.0
      %671 = vmatpush1.msra.mxu0 0.0
      %672 = vmatprep.subr.mxu0 0.0
      %673 = vmatpush1.msra.mxu0 0.0
      %674 = vmatprep.subr.mxu0 0.0
      %675 = vmatpush1.msra.mxu0 0.0
      %676 = vmatprep.subr.mxu0 0.0
      %677 = vmatpush1.msra.mxu0 0.0
      %678 = vmatprep.subr.mxu0 0.0
      %679 = vmatpush1.msra.mxu0 0.0
      %680 = vmatprep.subr.mxu0 0.0
      %681 = vmatpush1.msra.mxu0 0.0
      %682 = vmatprep.subr.mxu0 0.0
      %683 = vmatpush1.msra.mxu0 0.0
      %684 = vmatprep.subr.mxu0 0.0
      %685 = vmatpush1.msra.mxu0 0.0
      %686 = vmatprep.subr.mxu0 0.0
      %687 = vmatpush1.msra.mxu0 0.0
      %688 = vmatprep.subr.mxu0 0.0
      %689 = vmatpush1.msra.mxu0 0.0
      %690 = vmatprep.subr.mxu0 0.0
      %691 = vmatpush1.msra.mxu0 0.0
      %692 = vmatprep.subr.mxu0 0.0
      %693 = vmatpush1.msra.mxu0 0.0
      %694 = vmatprep.subr.mxu0 0.0
      %695 = vmatpush1.msra.mxu0 %v310
      %696 = vmatprep.subr.mxu0 0.0
      %697 = vmatpush1.msra.mxu0 %v309
      %698 = vmatprep.subr.mxu0 0.0
      %699 = vmatpush2.msra.mxu0 0.0
      %700 = vmatprep.subr.mxu0 0.0
      %701 = vmatpush2.msra.mxu0 0.0
      %702 = vmatprep.subr.mxu0 0.0
      %703 = vmatpush2.msra.mxu0 0.0
      %704 = vmatprep.subr.mxu0 0.0
      %705 = vmatpush2.msra.mxu0 0.0
      %706 = vmatprep.subr.mxu0 0.0
      %707 = vmatpush2.msra.mxu0 0.0
      %708 = vmatprep.subr.mxu0 0.0
      %709 = vmatpush2.msra.mxu0 0.0
      %710 = vmatprep.subr.mxu0 0.0
      %711 = vmatpush2.msra.mxu0 0.0
      %712 = vmatprep.subr.mxu0 0.0
      %713 = vmatpush2.msra.mxu0 0.0
      %714 = vmatprep.subr.mxu0 0.0
      %715 = vmatpush2.msra.mxu0 0.0
      %716 = vmatprep.subr.mxu0 0.0
      %717 = vmatpush2.msra.mxu0 0.0
      %718 = vmatprep.subr.mxu0 0.0
      %719 = vmatpush2.msra.mxu0 0.0
      %720 = vmatprep.subr.mxu0 0.0
      %721 = vmatpush2.msra.mxu0 0.0
      %722 = vmatprep.subr.mxu0 0.0
      %723 = vmatpush2.msra.mxu0 0.0
      %724 = vmatprep.subr.mxu0 0.0
      %725 = vmatpush2.msra.mxu0 0.0
      %726 = vmatprep.subr.mxu0 0.0
      %727 = vmatpush2.msra.mxu0 0.0
      %728 = vmatprep.subr.mxu0 0.0
      %729 = vmatpush2.msra.mxu0 0.0
      %730 = vmatprep.mubr.f32.mxu0 0.0
      %731 = vmatmul.mubr.f32.gmra.mxu0 %v619
      %v732 = vpop.f32.mrf.mxu0
      %v733 = vadd.f32 %v540, %v732
      %v734 = vpop.f32.mrf.mxu0
      %735 = vmatprep.mubr.f32.mxu0 0.0
      %736 = vmatmul.mubr.f32.gmra.mxu0 %v622
      %v737 = vpop.f32.mrf.mxu0
      %v738 = vadd.f32 %v545, %v737
      %v739 = vpop.f32.mrf.mxu0
      %740 = vmatprep.mubr.f32.mxu0 0.0
      %741 = vmatmul.mubr.f32.gmra.mxu0 %v625
      %v742 = vpop.f32.mrf.mxu0
      %v743 = vadd.f32 %v550, %v742
      %v744 = vpop.f32.mrf.mxu0
      %745 = vmatprep.mubr.f32.mxu0 0.0
      %746 = vmatmul.mubr.f32.gmra.mxu0 %v628
      %v747 = vpop.f32.mrf.mxu0
      %v748 = vadd.f32 %v555, %v747
      %v749 = vpop.f32.mrf.mxu0
      %750 = vmatprep.mubr.f32.mxu0 0.0
      %751 = vmatmul.mubr.f32.gmra.mxu0 %v631
      %v752 = vpop.f32.mrf.mxu0
      %v753 = vadd.f32 %v560, %v752
      %v754 = vpop.f32.mrf.mxu0
      %755 = vmatprep.mubr.f32.mxu0 0.0
      %756 = vmatmul.mubr.f32.gmra.mxu0 %v634
      %v757 = vpop.f32.mrf.mxu0
      %v758 = vadd.f32 %v565, %v757
      %v759 = vpop.f32.mrf.mxu0
      %760 = vmatprep.mubr.f32.mxu0 0.0
      %761 = vmatmul.mubr.f32.gmra.mxu0 %v637
      %v762 = vpop.f32.mrf.mxu0
      %v763 = vadd.f32 %v570, %v762
      %v764 = vpop.f32.mrf.mxu0
      %765 = vmatprep.mubr.f32.mxu0 0.0
      %766 = vmatmul.mubr.f32.gmra.mxu0 %v640
      %v767 = vpop.f32.mrf.mxu0
      %v768 = vadd.f32 %v575, %v767
      %v769 = vpop.f32.mrf.mxu0
      %770 = vmatprep.mubr.f32.mxu0 0.0
      %771 = vmatmul.mubr.f32.gmra.mxu0 %v643
      %v772 = vpop.f32.mrf.mxu0
      %v773 = vadd.f32 %v580, %v772
      %v774 = vpop.f32.mrf.mxu0
      %775 = vmatprep.mubr.f32.mxu0 0.0
      %776 = vmatmul.mubr.f32.gmra.mxu0 %v646
      %v777 = vpop.f32.mrf.mxu0
      %v778 = vadd.f32 %v585, %v777
      %v779 = vpop.f32.mrf.mxu0
      %780 = vmatprep.mubr.f32.mxu0 0.0
      %781 = vmatmul.mubr.f32.gmra.mxu0 %v649
      %v782 = vpop.f32.mrf.mxu0
      %v783 = vadd.f32 %v590, %v782
      %v784 = vpop.f32.mrf.mxu0
      %785 = vmatprep.mubr.f32.mxu0 0.0
      %786 = vmatmul.mubr.f32.gmra.mxu0 %v652
      %v787 = vpop.f32.mrf.mxu0
      %v788 = vadd.f32 %v595, %v787
      %v789 = vpop.f32.mrf.mxu0
      %790 = vmatprep.mubr.f32.mxu0 0.0
      %791 = vmatmul.mubr.f32.gmra.mxu0 %v655
      %v792 = vpop.f32.mrf.mxu0
      %v793 = vadd.f32 %v600, %v792
      %v794 = vpop.f32.mrf.mxu0
      %795 = vmatprep.mubr.f32.mxu0 0.0
      %796 = vmatmul.mubr.f32.gmra.mxu0 %v658
      %v797 = vpop.f32.mrf.mxu0
      %v798 = vadd.f32 %v605, %v797
      %v799 = vpop.f32.mrf.mxu0
      %800 = vmatprep.mubr.f32.mxu0 0.0
      %801 = vmatmul.mubr.f32.gmra.mxu0 %v661
      %v802 = vpop.f32.mrf.mxu0
      %v803 = vadd.f32 %v610, %v802
      %v804 = vpop.f32.mrf.mxu0
      %805 = vmatprep.mubr.f32.mxu0 0.0
      %806 = vmatmul.mubr.f32.gmra.mxu0 %v664
      %v807 = vpop.f32.mrf.mxu0
      %v808 = vadd.f32 %v615, %v807
      %v809 = vpop.f32.mrf.mxu0
      %810 = vdwg.mxu0
      %v811 = vld [vmem:[%s6] sm:$0x1]
      %v813 = vlaneseq
      %v814 = vshrl.u32 %v813, 7
      %v815 = vsub.s32 0, %v814
      %v816 = vrot.slane %v811, %v815
      %v818 = vmul.f32 %v816, %v330
      %v819 = vmul.f32 %v816, %v335
      %v820 = vmul.f32 %v816, %v340
      %v821 = vmul.f32 %v816, %v345
      %v822 = vmul.f32 %v816, %v350
      %v823 = vmul.f32 %v816, %v355
      %v824 = vmul.f32 %v816, %v360
      %v825 = vmul.f32 %v816, %v365
      %v826 = vmul.f32 %v816, %v370
      %v827 = vmul.f32 %v816, %v375
      %v828 = vmul.f32 %v816, %v380
      %v829 = vmul.f32 %v816, %v385
      %v830 = vmul.f32 %v816, %v390
      %v831 = vmul.f32 %v816, %v395
      %v832 = vmul.f32 %v816, %v400
      %v833 = vmul.f32 %v816, %v405
      %v834 = vadd.f32 %v733, %v818
      %v835 = vadd.f32 %v738, %v819
      %v836 = vadd.f32 %v743, %v820
      %v837 = vadd.f32 %v748, %v821
      %v838 = vadd.f32 %v753, %v822
      %v839 = vadd.f32 %v758, %v823
      %v840 = vadd.f32 %v763, %v824
      %v841 = vadd.f32 %v768, %v825
      %v842 = vadd.f32 %v773, %v826
      %v843 = vadd.f32 %v778, %v827
      %v844 = vadd.f32 %v783, %v828
      %v845 = vadd.f32 %v788, %v829
      %v846 = vadd.f32 %v793, %v830
      %v847 = vadd.f32 %v798, %v831
      %v848 = vadd.f32 %v803, %v832
      %v849 = vadd.f32 %v808, %v833
      %850 = vst [vmem:[#allocation3] sm:$0xff] %v834
      %851 = vst [vmem:[#allocation3 + $0x8] sm:$0xff] %v835
      %852 = vst [vmem:[#allocation3 + $0x10] sm:$0xff] %v836
      %853 = vst [vmem:[#allocation3 + $0x18] sm:$0xff] %v837
      %854 = vst [vmem:[#allocation3 + $0x20] sm:$0xff] %v838
      %855 = vst [vmem:[#allocation3 + $0x28] sm:$0xff] %v839
      %856 = vst [vmem:[#allocation3 + $0x30] sm:$0xff] %v840
      %857 = vst [vmem:[#allocation3 + $0x38] sm:$0xff] %v841
      %858 = vst [vmem:[#allocation3 + $0x40] sm:$0xff] %v842
      %859 = vst [vmem:[#allocation3 + $0x48] sm:$0xff] %v843
      %860 = vst [vmem:[#allocation3 + $0x50] sm:$0xff] %v844
      %861 = vst [vmem:[#allocation3 + $0x58] sm:$0xff] %v845
      %862 = vst [vmem:[#allocation3 + $0x60] sm:$0xff] %v846
      %863 = vst [vmem:[#allocation3 + $0x68] sm:$0xff] %v847
      %864 = vst [vmem:[#allocation3 + $0x70] sm:$0xff] %v848
      %865 = vst [vmem:[#allocation3 + $0x78] sm:$0xff] %v849
    $region37: #{tpu_custom_call.1} parent=1 // pred_fallthru
      _
    // Predicated region
    $region38: #{tpu_custom_call.1} parent=1 // pred_check
      _
    $region39: #{tpu_custom_call.1} parent=1 // pred_check_branch
      %867 = sbr.rel (0) target = $region41
    $region40: #{tpu_custom_call.1} parent=1 // pred_region
      %s869 = ssub.s32 2048, 2048
      %870 = vsyncadd [#allocation4], %s869
      %s871 = sshll.u32 [#allocation3], 4
      %s872 = int_to_ptr.vmem [resolvable:$true] %s871
      %877 = dma.vmem_to_hbm [thread:$0]  %s872, 2048, %s7, [#allocation4], 128, 128, 8
    $region41: #{tpu_custom_call.1} parent=1 // pred_fallthru
      _
    // Predicated region
    $region42: #{tpu_custom_call.1} parent=1 // pred_check
      _
    $region43: #{tpu_custom_call.1} parent=1 // pred_check_branch
      %879 = sbr.rel (0) target = $region45
    $region44: #{tpu_custom_call.1} parent=1 // pred_region
      %880 = dma.done [#allocation4], 2048
    $region45: #{tpu_custom_call.1} parent=1 // pred_fallthru
      _
    %881 = vsyncpa [#allocation4], 1

</llo_original>
